<compile_context>
chip_gen: v6e
topology: v6e:2x2x1
jax: 0.10.0
libtpu: 0.0.40
codegen_flags: <defaults>
</compile_context>

<pallas_src>
import math

import jax
import jax.numpy as jnp
from jax.experimental import pallas as pl
from jax.experimental.pallas import tpu as pltpu


LANE = 128              # output-side dims padded to the 128-lane vreg width
DEFAULT_BLOCK_B = 512   # batch tile (rows per grid step)


def _round_up(n, m):
    return ((n + m - 1) // m) * m


def _pad2d(a, rows, cols):
    return jnp.pad(a, ((0, rows - a.shape[0]), (0, cols - a.shape[1])))


def _num_tensorcores():
    # v7x has 2 TensorCores per chip; v5e/v6e have 1.  Best-effort detection.
    try:
        kind = jax.devices()[0].device_kind.lower()
        return 2 if "v7" in kind else 1
    except Exception:
        return 1


# ---------------------------------------------------------------------------
# Fused Pallas kernel: feat path + target path for one batch tile.
# ---------------------------------------------------------------------------
def _mlp_kernel(x_ref, y_ref,
                fw1, fb1, fw2, fb2, fw3, fb3, fw4, fb4,
                tw1, tb1, tw2, tb2, tw3, tb3,
                xo_ref, yo_ref):
    mm_dtype = fw1.dtype  # matmul operand dtype (bf16)

    def dense(h, w_ref, b_ref):
        # bf16 x bf16 -> f32 accumulate on the MXU; bias add in f32.
        return jnp.dot(h.astype(mm_dtype), w_ref[...],
                       preferred_element_type=jnp.float32) + b_ref[...]

    def l2_normalize(z):
        # F.normalize(z, p=2, dim=1) with eps=1e-12: clamp ||z||^2 at 1e-24,
        # rsqrt on the EUP + one multiply instead of sqrt + divide.
        ssq = jnp.sum(z * z, axis=-1, keepdims=True)
        return z * jax.lax.rsqrt(jnp.maximum(ssq, 1e-24))

    # feat_mlp: [BN]->Lin->[BN]->ReLU -> Lin->[BN]->ReLU -> Lin->[BN]->ReLU -> Lin
    # (all BN affines folded into the Linear weights/biases; Dropout = identity)
    h = jnp.maximum(dense(x_ref[...], fw1, fb1), 0.0)
    h = jnp.maximum(dense(h, fw2, fb2), 0.0)
    h = jnp.maximum(dense(h, fw3, fb3), 0.0)
    xo_ref[...] = l2_normalize(dense(h, fw4, fb4))

    # target_mlp: Lin->[BN]->ReLU -> Lin->[BN]->ReLU -> Lin
    g = jnp.maximum(dense(y_ref[...], tw1, tb1), 0.0)
    g = jnp.maximum(dense(g, tw2, tb2), 0.0)
    yo_ref[...] = l2_normalize(dense(g, tw3, tb3))


# ---------------------------------------------------------------------------
# Parameter setup: xavier Linear weights, eval-mode BN folded in, output-side
# dims zero-padded to lane-multiples, weights cast to bf16 (biases kept f32).
# ---------------------------------------------------------------------------
def _xavier_uniform(key, fan_in, fan_out):
    a = math.sqrt(6.0 / (fan_in + fan_out))
    return jax.random.uniform(key, (fan_in, fan_out), jnp.float32, -a, a)


def _bn_affine(dim, eps=1e-5):
    # fresh nn.BatchNorm1d in eval mode: gamma=1, beta=0, running mean=0, var=1
    gamma = jnp.ones((dim,), jnp.float32)
    beta = jnp.zeros((dim,), jnp.float32)
    mean = jnp.zeros((dim,), jnp.float32)
    var = jnp.ones((dim,), jnp.float32)
    s = gamma / jnp.sqrt(var + eps)
    b = beta - mean * s
    return s, b


def _fold_pre_bn(s, b, w, bias):
    # BN on the *input* of Linear(w, bias):  (x*s + b) @ w + bias
    return s[:, None] * w, b @ w + bias


def _fold_post_bn(w, bias, s, b):
    # BN on the *output* of Linear(w, bias): (x @ w + bias) * s + b
    return w * s[None, :], bias * s + b


def init_params(key, input_dim_feat, input_dim_target, hidden_dim_feat,
                output_dim_target, output_dim_feat):
    ks = jax.random.split(key, 7)
    H = hidden_dim_feat

    # Linear weights stored (in, out) == torch W.T; biases zero-initialized.
    f_w1 = _xavier_uniform(ks[0], input_dim_feat, H); f_b1 = jnp.zeros((H,), jnp.float32)
    f_w2 = _xavier_uniform(ks[1], H, H);              f_b2 = jnp.zeros((H,), jnp.float32)
    f_w3 = _xavier_uniform(ks[2], H, H);              f_b3 = jnp.zeros((H,), jnp.float32)
    f_w4 = _xavier_uniform(ks[3], H, output_dim_feat)
    f_b4 = jnp.zeros((output_dim_feat,), jnp.float32)
    t_w1 = _xavier_uniform(ks[4], input_dim_target, H); t_b1 = jnp.zeros((H,), jnp.float32)
    t_w2 = _xavier_uniform(ks[5], H, H);                t_b2 = jnp.zeros((H,), jnp.float32)
    t_w3 = _xavier_uniform(ks[6], H, output_dim_target)
    t_b3 = jnp.zeros((output_dim_target,), jnp.float32)

    # Fold eval-mode BatchNorm affines into the adjacent Linear layers.
    s0, c0 = _bn_affine(input_dim_feat)
    f_w1, f_b1 = _fold_pre_bn(s0, c0, f_w1, f_b1)                    # BN before Linear1
    s1, c1 = _bn_affine(H); f_w1, f_b1 = _fold_post_bn(f_w1, f_b1, s1, c1)
    s2, c2 = _bn_affine(H); f_w2, f_b2 = _fold_post_bn(f_w2, f_b2, s2, c2)
    s3, c3 = _bn_affine(H); f_w3, f_b3 = _fold_post_bn(f_w3, f_b3, s3, c3)
    u1, d1 = _bn_affine(H); t_w1, t_b1 = _fold_post_bn(t_w1, t_b1, u1, d1)
    u2, d2 = _bn_affine(H); t_w2, t_b2 = _fold_post_bn(t_w2, t_b2, u2, d2)

    raw = dict(f_w1=f_w1, f_b1=f_b1, f_w2=f_w2, f_b2=f_b2,
               f_w3=f_w3, f_b3=f_b3, f_w4=f_w4, f_b4=f_b4,
               t_w1=t_w1, t_b1=t_b1, t_w2=t_w2, t_b2=t_b2,
               t_w3=t_w3, t_b3=t_b3)
    dims = dict(Din=input_dim_feat, Dit=input_dim_target, H=H,
                Dof=output_dim_feat, Dot=output_dim_target)
    return raw, dims


def prepare_params(raw, dims, matmul_dtype=jnp.bfloat16):
    Din, Dit, H = dims["Din"], dims["Dit"], dims["H"]
    Dof, Dot = dims["Dof"], dims["Dot"]
    Hp = _round_up(H, LANE)
    Dofp, Dotp = _round_up(Dof, LANE), _round_up(Dot, LANE)

    def w(name, rows, cols):
        return _pad2d(raw[name], rows, cols).astype(matmul_dtype)

    def b(name, cols):
        return _pad2d(raw[name][None, :], 1, cols)  # biases stay f32

    # First-layer weights keep K = true input dim (inputs are NOT lane-padded);
    # only output-side dims get zero-padded so stores stay 128-lane dense.
    p = dict(
        f_w1=w("f_w1", Din, Hp), f_b1=b("f_b1", Hp),
        f_w2=w("f_w2", Hp, Hp),  f_b2=b("f_b2", Hp),
        f_w3=w("f_w3", Hp, Hp),  f_b3=b("f_b3", Hp),
        f_w4=w("f_w4", Hp, Dofp), f_b4=b("f_b4", Dofp),
        t_w1=w("t_w1", Dit, Hp), t_b1=b("t_b1", Hp),
        t_w2=w("t_w2", Hp, Hp),  t_b2=b("t_b2", Hp),
        t_w3=w("t_w3", Hp, Dotp), t_b3=b("t_b3", Dotp),
    )
    pdims = dict(Hp=Hp, Dofp=Dofp, Dotp=Dotp)
    return p, pdims


# ---------------------------------------------------------------------------
# Wrapper: batch-tiled, fused pallas_call.
# ---------------------------------------------------------------------------
def mlp_forward(x, y, p, dims, pdims, *, block_b=DEFAULT_BLOCK_B):
    B = x.shape[0]
    assert y.shape[0] == B
    Din, Dit = dims["Din"], dims["Dit"]
    Dof, Dot = dims["Dof"], dims["Dot"]
    Dofp, Dotp = pdims["Dofp"], pdims["Dotp"]

    # bf16 inputs: kernel casts to bf16 before the dot anyway, so results are
    # identical while input HBM traffic / double-buffer VMEM are halved.
    xb = x.astype(jnp.bfloat16)
    yb = y.astype(jnp.bfloat16)

    # Batch tile: biggest tile that fits (up to block_b); on dual-TC chips
    # (v7x) keep >= 2 grid steps so "parallel" can shard over both cores.
    Bp8 = _round_up(max(B, 1), 8)
    tb = min(block_b, Bp8)
    ncore = _num_tensorcores()
    if ncore > 1 and Bp8 >= ncore * 8:
        tb = min(tb, _round_up(-(-Bp8 // ncore), 8))
    Bp = _round_up(B, tb)
    if Bp != B:
        xb = jnp.pad(xb, ((0, Bp - B), (0, 0)))
        yb = jnp.pad(yb, ((0, Bp - B), (0, 0)))

    grid = (Bp // tb,)

    def batch_spec(cols):
        # cols == true feature dim (allowed: block dim equals full array dim)
        return pl.BlockSpec((tb, cols), lambda i: (i, 0))

    def resident_spec(arr):
        # whole array, constant index_map -> stays VMEM-resident across steps
        return pl.BlockSpec(arr.shape, lambda i: (0, 0))

    weight_args = (p["f_w1"], p["f_b1"], p["f_w2"], p["f_b2"],
                   p["f_w3"], p["f_b3"], p["f_w4"], p["f_b4"],
                   p["t_w1"], p["t_b1"], p["t_w2"], p["t_b2"],
                   p["t_w3"], p["t_b3"])

    in_specs = ([batch_spec(Din), batch_spec(Dit)]
                + [resident_spec(a) for a in weight_args])
    out_specs = (batch_spec(Dofp), batch_spec(Dotp))
    out_shape = (jax.ShapeDtypeStruct((Bp, Dofp), jnp.float32),
                 jax.ShapeDtypeStruct((Bp, Dotp), jnp.float32))

    x_emb_p, y_emb_p = pl.pallas_call(
        _mlp_kernel,
        grid=grid,
        in_specs=in_specs,
        out_specs=out_specs,
        out_shape=out_shape,
        compiler_params=pltpu.CompilerParams(
            dimension_semantics=("parallel",)),
    )(xb, yb, *weight_args)

    return x_emb_p[:B, :Dof], y_emb_p[:B, :Dot]


# ---------------------------------------------------------------------------
# Pure-JAX reference (same folded params, same bf16 matmul operands).
# ---------------------------------------------------------------------------
def _reference_forward(x, y, raw, matmul_dtype=jnp.bfloat16):
    def dense(h, w, b):
        return jnp.dot(h.astype(matmul_dtype), w.astype(matmul_dtype),
                       preferred_element_type=jnp.float32) + b

    def l2n(z):
        n = jnp.sqrt(jnp.sum(z * z, axis=1, keepdims=True))
        return z / jnp.maximum(n, 1e-12)

    h = jnp.maximum(dense(x, raw["f_w1"], raw["f_b1"]), 0.0)
    h = jnp.maximum(dense(h, raw["f_w2"], raw["f_b2"]), 0.0)
    h = jnp.maximum(dense(h, raw["f_w3"], raw["f_b3"]), 0.0)
    xe = l2n(dense(h, raw["f_w4"], raw["f_b4"]))

    g = jnp.maximum(dense(y, raw["t_w1"], raw["t_b1"]), 0.0)
    g = jnp.maximum(dense(g, raw["t_w2"], raw["t_b2"]), 0.0)
    ye = l2n(dense(g, raw["t_w3"], raw["t_b3"]))
    return xe, ye


# ---------------------------------------------------------------------------
# Demo
# ---------------------------------------------------------------------------
if __name__ == "__main__":
    batch = 32
    input_dim_feat = 64
    input_dim_target = 32
    hidden_dim_feat = 128
    output_dim_feat = 64
    output_dim_target = 32
    # dropout_rate is irrelevant in eval mode (identity)

    key = jax.random.PRNGKey(0)
    kx, ky, kp = jax.random.split(key, 3)
    x = jax.random.normal(kx, (batch, input_dim_feat), jnp.float32)
    y = jax.random.normal(ky, (batch, input_dim_target), jnp.float32)

    raw, dims = init_params(kp, input_dim_feat, input_dim_target,
                            hidden_dim_feat, output_dim_target, output_dim_feat)
    p, pdims = prepare_params(raw, dims, matmul_dtype=jnp.bfloat16)

    fwd = jax.jit(lambda xx, yy: mlp_forward(xx, yy, p, dims, pdims,
                                             block_b=DEFAULT_BLOCK_B))
    x_emb, y_emb = fwd(x, y)
    jax.block_until_ready((x_emb, y_emb))

    assert x_emb.shape == (batch, output_dim_feat)
    assert y_emb.shape == (batch, output_dim_target)
    # embeddings are L2-normalized along dim=1
    assert jnp.allclose(jnp.linalg.norm(x_emb, axis=1), 1.0, atol=1e-3)
    assert jnp.allclose(jnp.linalg.norm(y_emb, axis=1), 1.0, atol=1e-3)

    # compare against a pure-JAX reference using the same folded parameters
    x_exp, y_exp = _reference_forward(x, y, raw)
    assert jnp.allclose(x_emb, x_exp, atol=1e-2, rtol=1e-2)
    assert jnp.allclose(y_emb, y_exp, atol=1e-2, rtol=1e-2)

    print("KERNEL_OK")
</pallas_src>

<mosaic_0001>
module attributes {stable_mosaic.version = 11 : i64} {
  func.func @_mlp_kernel(%arg0: i32, %arg1: memref<32x64xbf16, #tpu.memory_space<vmem>>, %arg2: memref<32x32xbf16, #tpu.memory_space<vmem>>, %arg3: memref<64x128xbf16, #tpu.memory_space<vmem>>, %arg4: memref<1x128xf32, #tpu.memory_space<vmem>>, %arg5: memref<128x128xbf16, #tpu.memory_space<vmem>>, %arg6: memref<1x128xf32, #tpu.memory_space<vmem>>, %arg7: memref<128x128xbf16, #tpu.memory_space<vmem>>, %arg8: memref<1x128xf32, #tpu.memory_space<vmem>>, %arg9: memref<128x128xbf16, #tpu.memory_space<vmem>>, %arg10: memref<1x128xf32, #tpu.memory_space<vmem>>, %arg11: memref<32x128xbf16, #tpu.memory_space<vmem>>, %arg12: memref<1x128xf32, #tpu.memory_space<vmem>>, %arg13: memref<128x128xbf16, #tpu.memory_space<vmem>>, %arg14: memref<1x128xf32, #tpu.memory_space<vmem>>, %arg15: memref<128x128xbf16, #tpu.memory_space<vmem>>, %arg16: memref<1x128xf32, #tpu.memory_space<vmem>>, %arg17: memref<32x128xf32, #tpu.memory_space<vmem>>, %arg18: memref<32x128xf32, #tpu.memory_space<vmem>>) attributes {dimension_semantics = [#tpu.dimension_semantics<parallel>], iteration_bounds = array<i64: 1>, scalar_prefetch = 0 : i64, scratch_operands = 0 : i64, tpu.core_type = #tpu.core_type<tc>, window_params = [{transform_indices = @transform_0, window_bounds = array<i64: 32, 64>}, {transform_indices = @transform_1, window_bounds = array<i64: 32, 32>}, {pipeline_mode = #tpu.pipeline_mode<synchronous>, transform_indices = @transform_2, window_bounds = array<i64: 64, 128>}, {pipeline_mode = #tpu.pipeline_mode<synchronous>, transform_indices = @transform_3, window_bounds = array<i64: 1, 128>}, {pipeline_mode = #tpu.pipeline_mode<synchronous>, transform_indices = @transform_4, window_bounds = array<i64: 128, 128>}, {pipeline_mode = #tpu.pipeline_mode<synchronous>, transform_indices = @transform_5, window_bounds = array<i64: 1, 128>}, {pipeline_mode = #tpu.pipeline_mode<synchronous>, transform_indices = @transform_6, window_bounds = array<i64: 128, 128>}, {pipeline_mode = #tpu.pipeline_mode<synchronous>, transform_indices = @transform_7, window_bounds = array<i64: 1, 128>}, {pipeline_mode = #tpu.pipeline_mode<synchronous>, transform_indices = @transform_8, window_bounds = array<i64: 128, 128>}, {pipeline_mode = #tpu.pipeline_mode<synchronous>, transform_indices = @transform_9, window_bounds = array<i64: 1, 128>}, {pipeline_mode = #tpu.pipeline_mode<synchronous>, transform_indices = @transform_10, window_bounds = array<i64: 32, 128>}, {pipeline_mode = #tpu.pipeline_mode<synchronous>, transform_indices = @transform_11, window_bounds = array<i64: 1, 128>}, {pipeline_mode = #tpu.pipeline_mode<synchronous>, transform_indices = @transform_12, window_bounds = array<i64: 128, 128>}, {pipeline_mode = #tpu.pipeline_mode<synchronous>, transform_indices = @transform_13, window_bounds = array<i64: 1, 128>}, {pipeline_mode = #tpu.pipeline_mode<synchronous>, transform_indices = @transform_14, window_bounds = array<i64: 128, 128>}, {pipeline_mode = #tpu.pipeline_mode<synchronous>, transform_indices = @transform_15, window_bounds = array<i64: 1, 128>}, {transform_indices = @transform_16, window_bounds = array<i64: 32, 128>}, {transform_indices = @transform_17, window_bounds = array<i64: 32, 128>}]} {
    %c0 = arith.constant 0 : index
    %c0_0 = arith.constant 0 : index
    %0 = vector.load %arg1[%c0, %c0_0] : memref<32x64xbf16, #tpu.memory_space<vmem>>, vector<32x64xbf16>
    %c0_1 = arith.constant 0 : index
    %c0_2 = arith.constant 0 : index
    %1 = vector.load %arg3[%c0_1, %c0_2] : memref<64x128xbf16, #tpu.memory_space<vmem>>, vector<64x128xbf16>
    %cst = arith.constant dense<0.000000e+00> : vector<32x128xf32>
    %2 = tpu.matmul %0, %1, %cst {dimension_numbers = #tpu.dot_dimension_numbers<[1], [0], [0], [1], [0, 0, 1, 1], [], []>} : vector<32x64xbf16>, vector<64x128xbf16>, vector<32x128xf32> -> vector<32x128xf32>
    %c0_3 = arith.constant 0 : index
    %c0_4 = arith.constant 0 : index
    %3 = vector.load %arg4[%c0_3, %c0_4] : memref<1x128xf32, #tpu.memory_space<vmem>>, vector<1x128xf32>
    %4 = vector.broadcast %3 : vector<1x128xf32> to vector<32x128xf32>
    %5 = arith.addf %2, %4 : vector<32x128xf32>
    %cst_5 = arith.constant 0.000000e+00 : f32
    %6 = vector.broadcast %cst_5 : f32 to vector<32x128xf32>
    %7 = arith.maximumf %5, %6 : vector<32x128xf32>
    %8 = arith.truncf %7 : vector<32x128xf32> to vector<32x128xbf16>
    %c0_6 = arith.constant 0 : index
    %c0_7 = arith.constant 0 : index
    %9 = vector.load %arg5[%c0_6, %c0_7] : memref<128x128xbf16, #tpu.memory_space<vmem>>, vector<128x128xbf16>
    %cst_8 = arith.constant dense<0.000000e+00> : vector<32x128xf32>
    %10 = tpu.matmul %8, %9, %cst_8 {dimension_numbers = #tpu.dot_dimension_numbers<[1], [0], [0], [1], [0, 0, 1, 1], [], []>} : vector<32x128xbf16>, vector<128x128xbf16>, vector<32x128xf32> -> vector<32x128xf32>
    %c0_9 = arith.constant 0 : index
    %c0_10 = arith.constant 0 : index
    %11 = vector.load %arg6[%c0_9, %c0_10] : memref<1x128xf32, #tpu.memory_space<vmem>>, vector<1x128xf32>
    %12 = vector.broadcast %11 : vector<1x128xf32> to vector<32x128xf32>
    %13 = arith.addf %10, %12 : vector<32x128xf32>
    %cst_11 = arith.constant 0.000000e+00 : f32
    %14 = vector.broadcast %cst_11 : f32 to vector<32x128xf32>
    %15 = arith.maximumf %13, %14 : vector<32x128xf32>
    %16 = arith.truncf %15 : vector<32x128xf32> to vector<32x128xbf16>
    %c0_12 = arith.constant 0 : index
    %c0_13 = arith.constant 0 : index
    %17 = vector.load %arg7[%c0_12, %c0_13] : memref<128x128xbf16, #tpu.memory_space<vmem>>, vector<128x128xbf16>
    %cst_14 = arith.constant dense<0.000000e+00> : vector<32x128xf32>
    %18 = tpu.matmul %16, %17, %cst_14 {dimension_numbers = #tpu.dot_dimension_numbers<[1], [0], [0], [1], [0, 0, 1, 1], [], []>} : vector<32x128xbf16>, vector<128x128xbf16>, vector<32x128xf32> -> vector<32x128xf32>
    %c0_15 = arith.constant 0 : index
    %c0_16 = arith.constant 0 : index
    %19 = vector.load %arg8[%c0_15, %c0_16] : memref<1x128xf32, #tpu.memory_space<vmem>>, vector<1x128xf32>
    %20 = vector.broadcast %19 : vector<1x128xf32> to vector<32x128xf32>
    %21 = arith.addf %18, %20 : vector<32x128xf32>
    %cst_17 = arith.constant 0.000000e+00 : f32
    %22 = vector.broadcast %cst_17 : f32 to vector<32x128xf32>
    %23 = arith.maximumf %21, %22 : vector<32x128xf32>
    %24 = arith.truncf %23 : vector<32x128xf32> to vector<32x128xbf16>
    %c0_18 = arith.constant 0 : index
    %c0_19 = arith.constant 0 : index
    %25 = vector.load %arg9[%c0_18, %c0_19] : memref<128x128xbf16, #tpu.memory_space<vmem>>, vector<128x128xbf16>
    %cst_20 = arith.constant dense<0.000000e+00> : vector<32x128xf32>
    %26 = tpu.matmul %24, %25, %cst_20 {dimension_numbers = #tpu.dot_dimension_numbers<[1], [0], [0], [1], [0, 0, 1, 1], [], []>} : vector<32x128xbf16>, vector<128x128xbf16>, vector<32x128xf32> -> vector<32x128xf32>
    %c0_21 = arith.constant 0 : index
    %c0_22 = arith.constant 0 : index
    %27 = vector.load %arg10[%c0_21, %c0_22] : memref<1x128xf32, #tpu.memory_space<vmem>>, vector<1x128xf32>
    %28 = vector.broadcast %27 : vector<1x128xf32> to vector<32x128xf32>
    %29 = arith.addf %26, %28 : vector<32x128xf32>
    %30 = arith.mulf %29, %29 : vector<32x128xf32>
    %cst_23 = arith.constant dense<0.000000e+00> : vector<32xf32>
    %31 = vector.multi_reduction <add>, %30, %cst_23 [1] : vector<32x128xf32> to vector<32xf32>
    %32 = vector.shape_cast %31 : vector<32xf32> to vector<32x1xf32>
    %cst_24 = arith.constant 1.000000e-24 : f32
    %33 = vector.broadcast %cst_24 : f32 to vector<32x1xf32>
    %34 = arith.maximumf %32, %33 : vector<32x1xf32>
    %35 = math.rsqrt %34 : vector<32x1xf32>
    %36 = vector.broadcast %35 : vector<32x1xf32> to vector<32x128xf32>
    %37 = arith.mulf %29, %36 : vector<32x128xf32>
    %c0_25 = arith.constant 0 : index
    %c0_26 = arith.constant 0 : index
    %38 = vector.load %arg17[%c0_25, %c0_26] : memref<32x128xf32, #tpu.memory_space<vmem>>, vector<32x128xf32>
    tpu.vector_store %arg17[%c0_25, %c0_26], %37 {strides = array<i32>} : memref<32x128xf32, #tpu.memory_space<vmem>>, vector<32x128xf32>,
    %c0_27 = arith.constant 0 : index
    %c0_28 = arith.constant 0 : index
    %39 = vector.load %arg2[%c0_27, %c0_28] : memref<32x32xbf16, #tpu.memory_space<vmem>>, vector<32x32xbf16>
    %c0_29 = arith.constant 0 : index
    %c0_30 = arith.constant 0 : index
    %40 = vector.load %arg11[%c0_29, %c0_30] : memref<32x128xbf16, #tpu.memory_space<vmem>>, vector<32x128xbf16>
    %cst_31 = arith.constant dense<0.000000e+00> : vector<32x128xf32>
    %41 = tpu.matmul %39, %40, %cst_31 {dimension_numbers = #tpu.dot_dimension_numbers<[1], [0], [0], [1], [0, 0, 1, 1], [], []>} : vector<32x32xbf16>, vector<32x128xbf16>, vector<32x128xf32> -> vector<32x128xf32>
    %c0_32 = arith.constant 0 : index
    %c0_33 = arith.constant 0 : index
    %42 = vector.load %arg12[%c0_32, %c0_33] : memref<1x128xf32, #tpu.memory_space<vmem>>, vector<1x128xf32>
    %43 = vector.broadcast %42 : vector<1x128xf32> to vector<32x128xf32>
    %44 = arith.addf %41, %43 : vector<32x128xf32>
    %cst_34 = arith.constant 0.000000e+00 : f32
    %45 = vector.broadcast %cst_34 : f32 to vector<32x128xf32>
    %46 = arith.maximumf %44, %45 : vector<32x128xf32>
    %47 = arith.truncf %46 : vector<32x128xf32> to vector<32x128xbf16>
    %c0_35 = arith.constant 0 : index
    %c0_36 = arith.constant 0 : index
    %48 = vector.load %arg13[%c0_35, %c0_36] : memref<128x128xbf16, #tpu.memory_space<vmem>>, vector<128x128xbf16>
    %cst_37 = arith.constant dense<0.000000e+00> : vector<32x128xf32>
    %49 = tpu.matmul %47, %48, %cst_37 {dimension_numbers = #tpu.dot_dimension_numbers<[1], [0], [0], [1], [0, 0, 1, 1], [], []>} : vector<32x128xbf16>, vector<128x128xbf16>, vector<32x128xf32> -> vector<32x128xf32>
    %c0_38 = arith.constant 0 : index
    %c0_39 = arith.constant 0 : index
    %50 = vector.load %arg14[%c0_38, %c0_39] : memref<1x128xf32, #tpu.memory_space<vmem>>, vector<1x128xf32>
    %51 = vector.broadcast %50 : vector<1x128xf32> to vector<32x128xf32>
    %52 = arith.addf %49, %51 : vector<32x128xf32>
    %cst_40 = arith.constant 0.000000e+00 : f32
    %53 = vector.broadcast %cst_40 : f32 to vector<32x128xf32>
    %54 = arith.maximumf %52, %53 : vector<32x128xf32>
    %55 = arith.truncf %54 : vector<32x128xf32> to vector<32x128xbf16>
    %c0_41 = arith.constant 0 : index
    %c0_42 = arith.constant 0 : index
    %56 = vector.load %arg15[%c0_41, %c0_42] : memref<128x128xbf16, #tpu.memory_space<vmem>>, vector<128x128xbf16>
    %cst_43 = arith.constant dense<0.000000e+00> : vector<32x128xf32>
    %57 = tpu.matmul %55, %56, %cst_43 {dimension_numbers = #tpu.dot_dimension_numbers<[1], [0], [0], [1], [0, 0, 1, 1], [], []>} : vector<32x128xbf16>, vector<128x128xbf16>, vector<32x128xf32> -> vector<32x128xf32>
    %c0_44 = arith.constant 0 : index
    %c0_45 = arith.constant 0 : index
    %58 = vector.load %arg16[%c0_44, %c0_45] : memref<1x128xf32, #tpu.memory_space<vmem>>, vector<1x128xf32>
    %59 = vector.broadcast %58 : vector<1x128xf32> to vector<32x128xf32>
    %60 = arith.addf %57, %59 : vector<32x128xf32>
    %61 = arith.mulf %60, %60 : vector<32x128xf32>
    %cst_46 = arith.constant dense<0.000000e+00> : vector<32xf32>
    %62 = vector.multi_reduction <add>, %61, %cst_46 [1] : vector<32x128xf32> to vector<32xf32>
    %63 = vector.shape_cast %62 : vector<32xf32> to vector<32x1xf32>
    %cst_47 = arith.constant 1.000000e-24 : f32
    %64 = vector.broadcast %cst_47 : f32 to vector<32x1xf32>
    %65 = arith.maximumf %63, %64 : vector<32x1xf32>
    %66 = math.rsqrt %65 : vector<32x1xf32>
    %67 = vector.broadcast %66 : vector<32x1xf32> to vector<32x128xf32>
    %68 = arith.mulf %60, %67 : vector<32x128xf32>
    %c0_48 = arith.constant 0 : index
    %c0_49 = arith.constant 0 : index
    %69 = vector.load %arg18[%c0_48, %c0_49] : memref<32x128xf32, #tpu.memory_space<vmem>>, vector<32x128xf32>
    tpu.vector_store %arg18[%c0_48, %c0_49], %68 {strides = array<i32>} : memref<32x128xf32, #tpu.memory_space<vmem>>, vector<32x128xf32>,
    return
  }
  func.func @transform_0(%arg0: i32) -> (i32, i32) {
    %c0_i32 = arith.constant 0 : i32
    %c0_i32_0 = arith.constant 0 : i32
    return %arg0, %c0_i32 : i32, i32
  }
  func.func @transform_1(%arg0: i32) -> (i32, i32) {
    %c0_i32 = arith.constant 0 : i32
    %c0_i32_0 = arith.constant 0 : i32
    return %arg0, %c0_i32 : i32, i32
  }
  func.func @transform_2(%arg0: i32) -> (i32, i32) {
    %c0_i32 = arith.constant 0 : i32
    %c0_i32_0 = arith.constant 0 : i32
    %c0_i32_1 = arith.constant 0 : i32
    return %c0_i32, %c0_i32_0 : i32, i32
  }
  func.func @transform_3(%arg0: i32) -> (i32, i32) {
    %c0_i32 = arith.constant 0 : i32
    %c0_i32_0 = arith.constant 0 : i32
    %c0_i32_1 = arith.constant 0 : i32
    return %c0_i32, %c0_i32_0 : i32, i32
  }
  func.func @transform_4(%arg0: i32) -> (i32, i32) {
    %c0_i32 = arith.constant 0 : i32
    %c0_i32_0 = arith.constant 0 : i32
    %c0_i32_1 = arith.constant 0 : i32
    return %c0_i32, %c0_i32_0 : i32, i32
  }
  func.func @transform_5(%arg0: i32) -> (i32, i32) {
    %c0_i32 = arith.constant 0 : i32
    %c0_i32_0 = arith.constant 0 : i32
    %c0_i32_1 = arith.constant 0 : i32
    return %c0_i32, %c0_i32_0 : i32, i32
  }
  func.func @transform_6(%arg0: i32) -> (i32, i32) {
    %c0_i32 = arith.constant 0 : i32
    %c0_i32_0 = arith.constant 0 : i32
    %c0_i32_1 = arith.constant 0 : i32
    return %c0_i32, %c0_i32_0 : i32, i32
  }
  func.func @transform_7(%arg0: i32) -> (i32, i32) {
    %c0_i32 = arith.constant 0 : i32
    %c0_i32_0 = arith.constant 0 : i32
    %c0_i32_1 = arith.constant 0 : i32
    return %c0_i32, %c0_i32_0 : i32, i32
  }
  func.func @transform_8(%arg0: i32) -> (i32, i32) {
    %c0_i32 = arith.constant 0 : i32
    %c0_i32_0 = arith.constant 0 : i32
    %c0_i32_1 = arith.constant 0 : i32
    return %c0_i32, %c0_i32_0 : i32, i32
  }
  func.func @transform_9(%arg0: i32) -> (i32, i32) {
    %c0_i32 = arith.constant 0 : i32
    %c0_i32_0 = arith.constant 0 : i32
    %c0_i32_1 = arith.constant 0 : i32
    return %c0_i32, %c0_i32_0 : i32, i32
  }
  func.func @transform_10(%arg0: i32) -> (i32, i32) {
    %c0_i32 = arith.constant 0 : i32
    %c0_i32_0 = arith.constant 0 : i32
    %c0_i32_1 = arith.constant 0 : i32
    return %c0_i32, %c0_i32_0 : i32, i32
  }
  func.func @transform_11(%arg0: i32) -> (i32, i32) {
    %c0_i32 = arith.constant 0 : i32
    %c0_i32_0 = arith.constant 0 : i32
    %c0_i32_1 = arith.constant 0 : i32
    return %c0_i32, %c0_i32_0 : i32, i32
  }
  func.func @transform_12(%arg0: i32) -> (i32, i32) {
    %c0_i32 = arith.constant 0 : i32
    %c0_i32_0 = arith.constant 0 : i32
    %c0_i32_1 = arith.constant 0 : i32
    return %c0_i32, %c0_i32_0 : i32, i32
  }
  func.func @transform_13(%arg0: i32) -> (i32, i32) {
    %c0_i32 = arith.constant 0 : i32
    %c0_i32_0 = arith.constant 0 : i32
    %c0_i32_1 = arith.constant 0 : i32
    return %c0_i32, %c0_i32_0 : i32, i32
  }
  func.func @transform_14(%arg0: i32) -> (i32, i32) {
    %c0_i32 = arith.constant 0 : i32
    %c0_i32_0 = arith.constant 0 : i32
    %c0_i32_1 = arith.constant 0 : i32
    return %c0_i32, %c0_i32_0 : i32, i32
  }
  func.func @transform_15(%arg0: i32) -> (i32, i32) {
    %c0_i32 = arith.constant 0 : i32
    %c0_i32_0 = arith.constant 0 : i32
    %c0_i32_1 = arith.constant 0 : i32
    return %c0_i32, %c0_i32_0 : i32, i32
  }
  func.func @transform_16(%arg0: i32) -> (i32, i32) {
    %c0_i32 = arith.constant 0 : i32
    %c0_i32_0 = arith.constant 0 : i32
    return %arg0, %c0_i32 : i32, i32
  }
  func.func @transform_17(%arg0: i32) -> (i32, i32) {
    %c0_i32 = arith.constant 0 : i32
    %c0_i32_0 = arith.constant 0 : i32
    return %arg0, %c0_i32 : i32, i32
  }
}

</mosaic_0001>

<llo_original>
// kernel: _lambda_.1
$region0: #{_lambda_.1}
  #allocation0 [shape = 'u32[]', space=smem, size = 0x4, offset = 0x4, fixed_abs, tag = 'smem constant byte address 0x4 - core index']
  #allocation1 [shape = 'u32[144,128]{1,0:T(1,128)}', space=vmem, size = 0x12000, scoped, tag = 'internal scratch']
  %s0 = inlined_call_operand.vmem [shape: bf16[32,64], index: 0, kind: input, shape index: {}]
  %s1 = inlined_call_operand.vmem [shape: bf16[32,32], index: 1, kind: input, shape index: {}]
  %s2 = inlined_call_operand.vmem [shape: bf16[64,128], index: 2, kind: input, shape index: {}]
  %s3 = inlined_call_operand.vmem [shape: f32[1,128], index: 3, kind: input, shape index: {}, may-alias: {3,5,7,9,11,13,15}]
  %s4 = inlined_call_operand.hbm [shape: bf16[128,128], index: 4, kind: input, shape index: {}]
  %s5 = inlined_call_operand.vmem [shape: f32[1,128], index: 5, kind: input, shape index: {}, may-alias: {3,5,7,9,11,13,15}]
  %s6 = inlined_call_operand.hbm [shape: bf16[128,128], index: 6, kind: input, shape index: {}]
  %s7 = inlined_call_operand.vmem [shape: f32[1,128], index: 7, kind: input, shape index: {}, may-alias: {3,5,7,9,11,13,15}]
  %s8 = inlined_call_operand.hbm [shape: bf16[128,128], index: 8, kind: input, shape index: {}]
  %s9 = inlined_call_operand.vmem [shape: f32[1,128], index: 9, kind: input, shape index: {}, may-alias: {3,5,7,9,11,13,15}]
  %s10 = inlined_call_operand.vmem [shape: bf16[32,128], index: 10, kind: input, shape index: {}]
  %s11 = inlined_call_operand.vmem [shape: f32[1,128], index: 11, kind: input, shape index: {}, may-alias: {3,5,7,9,11,13,15}]
  %s12 = inlined_call_operand.hbm [shape: bf16[128,128], index: 12, kind: input, shape index: {}]
  %s13 = inlined_call_operand.vmem [shape: f32[1,128], index: 13, kind: input, shape index: {}, may-alias: {3,5,7,9,11,13,15}]
  %s14 = inlined_call_operand.vmem [shape: bf16[128,128], index: 14, kind: input, shape index: {}]
  %s15 = inlined_call_operand.vmem [shape: f32[1,128], index: 15, kind: input, shape index: {}, may-alias: {3,5,7,9,11,13,15}]
  %s16 = inlined_call_operand.hbm [shape: f32[32,128], index: 16, kind: output, shape index: {0}]
  %s17 = inlined_call_operand.hbm [shape: f32[32,128], index: 17, kind: output, shape index: {1}]
  %18 = xla_tuple %s16, %s17
  %s19 = sld [smem:[#allocation0]]
  $region98: #{_lambda_.1} parent=0
    _
  %s21 = ssub.s32 1, %s19
  %s22 = scalar_select 0, %s21, %s19
  $region1: #{_lambda_.1} parent=0
    #allocation2 [shape = 'u8[32768]{0}', space=vmem, size = 0x8000, scoped, tag = 'input window, operand 4, single buffered']
    #allocation3 [shape = 's32[1]{0}', space=sflag, size = 0x4, scoped, tag = 'scoped memory for _lambda_.1']
    #allocation4 [shape = 's32[1]{0}', space=sflag, size = 0x4, scoped, tag = 'scoped memory for _lambda_.1']
    #allocation5 [shape = 'u8[32768]{0}', space=vmem, size = 0x8000, scoped, tag = 'input window, operand 6, single buffered']
    #allocation6 [shape = 's32[1]{0}', space=sflag, size = 0x4, scoped, tag = 'scoped memory for _lambda_.1']
    #allocation7 [shape = 'u8[32768]{0}', space=vmem, size = 0x8000, scoped, tag = 'input window, operand 8, single buffered']
    #allocation8 [shape = 'u8[32768]{0}', space=vmem, size = 0x8000, scoped, tag = 'input window, operand 12, single buffered']
    #allocation9 [shape = 's32[1]{0}', space=sflag, size = 0x4, scoped, tag = 'scoped memory for _lambda_.1']
    #allocation10 [shape = 'u8[16384]{0}', space=vmem, size = 0x4000, scoped, tag = 'output window, operand 0, single buffered']
    #allocation11 [shape = 'u8[16384]{0}', space=vmem, size = 0x4000, scoped, tag = 'output window, operand 1, single buffered']
    #allocation12 [shape = 's32[1]{0}', space=sflag, size = 0x4, scoped, tag = 'scoped memory for _lambda_.1']
    %23 = vsyncpa [#allocation3], 0
    %24 = vsyncpa [#allocation6], 0
    %25 = vsyncpa [#allocation9], 0
    %26 = vsyncpa [#allocation4], 0
    %27 = vsyncpa [#allocation12], 0
    // Predicated region
    $region2: #{_lambda_.1} parent=1 // pred_check
      _
    $region3: #{_lambda_.1} parent=1 // pred_check_branch
      %29 = sbr.rel (0) target = $region5
    $region4: #{_lambda_.1} parent=1 // pred_region
      _
    $region5: #{_lambda_.1} parent=1 // pred_fallthru
      _
    // Predicated region
    $region6: #{_lambda_.1} parent=1 // pred_check
      _
    $region7: #{_lambda_.1} parent=1 // pred_check_branch
      %31 = sbr.rel (0) target = $region9
    $region8: #{_lambda_.1} parent=1 // pred_region
      _
    $region9: #{_lambda_.1} parent=1 // pred_fallthru
      _
    // Predicated region
    $region10: #{_lambda_.1} parent=1 // pred_check
      _
    $region11: #{_lambda_.1} parent=1 // pred_check_branch
      %33 = sbr.rel (0) target = $region13
    $region12: #{_lambda_.1} parent=1 // pred_region
      _
    $region13: #{_lambda_.1} parent=1 // pred_fallthru
      _
    // Predicated region
    $region14: #{_lambda_.1} parent=1 // pred_check
      _
    $region15: #{_lambda_.1} parent=1 // pred_check_branch
      %35 = sbr.rel (0) target = $region17
    $region16: #{_lambda_.1} parent=1 // pred_region
      _
    $region17: #{_lambda_.1} parent=1 // pred_fallthru
      _
    // Predicated region
    $region18: #{_lambda_.1} parent=1 // pred_check
      _
    $region19: #{_lambda_.1} parent=1 // pred_check_branch
      %37 = sbr.rel (0) target = $region21
    $region20: #{_lambda_.1} parent=1 // pred_region
      %s39 = ssub.s32 1024, 1024
      %40 = vsyncadd [#allocation3], %s39
      %s41 = sshll.u32 [#allocation2], 4
      %s42 = int_to_ptr.vmem [resolvable:$true] %s41
      %47 = dma.hbm_to_vmem [thread:$0]  %s4, 1024, %s42, [#allocation3], 64, 64, 4
    $region21: #{_lambda_.1} parent=1 // pred_fallthru
      _
    // Predicated region
    $region22: #{_lambda_.1} parent=1 // pred_check
      _
    $region23: #{_lambda_.1} parent=1 // pred_check_branch
      %49 = sbr.rel (0) target = $region25
    $region24: #{_lambda_.1} parent=1 // pred_region
      _
    $region25: #{_lambda_.1} parent=1 // pred_fallthru
      _
    // Predicated region
    $region26: #{_lambda_.1} parent=1 // pred_check
      _
    $region27: #{_lambda_.1} parent=1 // pred_check_branch
      %51 = sbr.rel (0) target = $region29
    $region28: #{_lambda_.1} parent=1 // pred_region
      %s53 = ssub.s32 1024, 1024
      %54 = vsyncadd [#allocation6], %s53
      %s55 = sshll.u32 [#allocation5], 4
      %s56 = int_to_ptr.vmem [resolvable:$true] %s55
      %61 = dma.hbm_to_vmem [thread:$0]  %s6, 1024, %s56, [#allocation6], 64, 64, 4
    $region29: #{_lambda_.1} parent=1 // pred_fallthru
      _
    // Predicated region
    $region30: #{_lambda_.1} parent=1 // pred_check
      _
    $region31: #{_lambda_.1} parent=1 // pred_check_branch
      %63 = sbr.rel (0) target = $region33
    $region32: #{_lambda_.1} parent=1 // pred_region
      _
    $region33: #{_lambda_.1} parent=1 // pred_fallthru
      _
    // Predicated region
    $region34: #{_lambda_.1} parent=1 // pred_check
      _
    $region35: #{_lambda_.1} parent=1 // pred_check_branch
      %65 = sbr.rel (0) target = $region37
    $region36: #{_lambda_.1} parent=1 // pred_region
      %s67 = ssub.s32 1024, 1024
      %68 = vsyncadd [#allocation6], %s67
      %s69 = sshll.u32 [#allocation7], 4
      %s70 = int_to_ptr.vmem [resolvable:$true] %s69
      %75 = dma.hbm_to_vmem [thread:$0]  %s8, 1024, %s70, [#allocation6], 64, 64, 4
    $region37: #{_lambda_.1} parent=1 // pred_fallthru
      _
    // Predicated region
    $region38: #{_lambda_.1} parent=1 // pred_check
      _
    $region39: #{_lambda_.1} parent=1 // pred_check_branch
      %77 = sbr.rel (0) target = $region41
    $region40: #{_lambda_.1} parent=1 // pred_region
      _
    $region41: #{_lambda_.1} parent=1 // pred_fallthru
      _
    // Predicated region
    $region42: #{_lambda_.1} parent=1 // pred_check
      _
    $region43: #{_lambda_.1} parent=1 // pred_check_branch
      %79 = sbr.rel (0) target = $region45
    $region44: #{_lambda_.1} parent=1 // pred_region
      _
    $region45: #{_lambda_.1} parent=1 // pred_fallthru
      _
    // Predicated region
    $region46: #{_lambda_.1} parent=1 // pred_check
      _
    $region47: #{_lambda_.1} parent=1 // pred_check_branch
      %81 = sbr.rel (0) target = $region49
    $region48: #{_lambda_.1} parent=1 // pred_region
      _
    $region49: #{_lambda_.1} parent=1 // pred_fallthru
      _
    // Predicated region
    $region50: #{_lambda_.1} parent=1 // pred_check
      _
    $region51: #{_lambda_.1} parent=1 // pred_check_branch
      %83 = sbr.rel (0) target = $region53
    $region52: #{_lambda_.1} parent=1 // pred_region
      %s85 = ssub.s32 1024, 1024
      %86 = vsyncadd [#allocation9], %s85
      %s87 = sshll.u32 [#allocation8], 4
      %s88 = int_to_ptr.vmem [resolvable:$true] %s87
      %93 = dma.hbm_to_vmem [thread:$0]  %s12, 1024, %s88, [#allocation9], 64, 64, 4
    $region53: #{_lambda_.1} parent=1 // pred_fallthru
      _
    // Predicated region
    $region54: #{_lambda_.1} parent=1 // pred_check
      _
    $region55: #{_lambda_.1} parent=1 // pred_check_branch
      %95 = sbr.rel (0) target = $region57
    $region56: #{_lambda_.1} parent=1 // pred_region
      _
    $region57: #{_lambda_.1} parent=1 // pred_fallthru
      _
    // Predicated region
    $region58: #{_lambda_.1} parent=1 // pred_check
      _
    $region59: #{_lambda_.1} parent=1 // pred_check_branch
      %97 = sbr.rel (0) target = $region61
    $region60: #{_lambda_.1} parent=1 // pred_region
      _
    $region61: #{_lambda_.1} parent=1 // pred_fallthru
      _
    // Predicated region
    $region62: #{_lambda_.1} parent=1 // pred_check
      _
    $region63: #{_lambda_.1} parent=1 // pred_check_branch
      %99 = sbr.rel (0) target = $region65
    $region64: #{_lambda_.1} parent=1 // pred_region
      _
    $region65: #{_lambda_.1} parent=1 // pred_fallthru
      _
    // Predicated region
    $region66: #{_lambda_.1} parent=1 // pred_check
      _
    $region67: #{_lambda_.1} parent=1 // pred_check_branch
      %101 = sbr.rel (0) target = $region69
    $region68: #{_lambda_.1} parent=1 // pred_region
      %102 = dma.done [#allocation3], 1024
    $region69: #{_lambda_.1} parent=1 // pred_fallthru
      _
    // Predicated region
    $region70: #{_lambda_.1} parent=1 // pred_check
      _
    $region71: #{_lambda_.1} parent=1 // pred_check_branch
      %104 = sbr.rel (0) target = $region73
    $region72: #{_lambda_.1} parent=1 // pred_region
      %105 = dma.done [#allocation6], 1024
    $region73: #{_lambda_.1} parent=1 // pred_fallthru
      _
    // Predicated region
    $region74: #{_lambda_.1} parent=1 // pred_check
      _
    $region75: #{_lambda_.1} parent=1 // pred_check_branch
      %107 = sbr.rel (0) target = $region77
    $region76: #{_lambda_.1} parent=1 // pred_region
      %108 = dma.done [#allocation6], 1024
    $region77: #{_lambda_.1} parent=1 // pred_fallthru
      _
    // Predicated region
    $region78: #{_lambda_.1} parent=1 // pred_check
      _
    $region79: #{_lambda_.1} parent=1 // pred_check_branch
      %110 = sbr.rel (0) target = $region81
    $region80: #{_lambda_.1} parent=1 // pred_region
      %111 = dma.done [#allocation9], 1024
    $region81: #{_lambda_.1} parent=1 // pred_fallthru
      _
    %v113 = vld [vmem:[%s0] sm:$0xf]
    %v114 = vld [vmem:[%s0 + $0x4] sm:$0xf]
    %v115 = vld [vmem:[%s0 + $0x8] sm:$0xf]
    %v116 = vld [vmem:[%s0 + $0xc] sm:$0xf]
    %v117 = vld [vmem:[%s2] sm:$0xf]
    %v118 = vld [vmem:[%s2 + $0x4] sm:$0xf]
    %v119 = vld [vmem:[%s2 + $0x8] sm:$0xf]
    %v120 = vld [vmem:[%s2 + $0xc] sm:$0xf]
    %v121 = vld [vmem:[%s2 + $0x10] sm:$0xf]
    %v122 = vld [vmem:[%s2 + $0x14] sm:$0xf]
    %v123 = vld [vmem:[%s2 + $0x18] sm:$0xf]
    %v124 = vld [vmem:[%s2 + $0x1c] sm:$0xf]
    %v125 = vld [vmem:[%s3] sm:$0x1]
    %v127 = vlaneseq
    %v128 = vshrl.u32 %v127, 7
    %v129 = vsub.s32 0, %v128
    %v130 = vrot.slane %v125, %v129
    %v136 = vunpack.c.l.b16 %v113
    %v137 = vunpack.c.l.b16 %v114
    %v138 = vunpack.c.l.b16 %v115
    %v139 = vunpack.c.l.b16 %v116
    %v140 = vpack.c.b16 %v137, %v136
    %v141 = vpack.c.b16 %v139, %v138
    %v150 = vunpack.c.l.b16 %v117
    %v151 = vunpack.c.l.b16 %v118
    %v152 = vunpack.c.l.b16 %v119
    %v153 = vunpack.c.l.b16 %v120
    %v154 = vunpack.c.l.b16 %v121
    %v155 = vunpack.c.l.b16 %v122
    %v156 = vunpack.c.l.b16 %v123
    %v157 = vunpack.c.l.b16 %v124
    %v158 = vpack.c.b16 %v151, %v150
    %v159 = vpack.c.b16 %v153, %v152
    %v160 = vpack.c.b16 %v155, %v154
    %v161 = vpack.c.b16 %v157, %v156
    %vm166 = vcmask 523264
    %v168 = vsel %vm166, %v140, 0
    %v171 = vsel %vm166, %v141, 0
    %173 = vmatprep.subr.bf16.mxu0 0
    %174 = vmatpush1.bf16.msra.mxu0 0
    %175 = vmatprep.subr.bf16.mxu0 0
    %176 = vmatpush1.bf16.msra.mxu0 0
    %177 = vmatprep.subr.bf16.mxu0 0
    %178 = vmatpush1.bf16.msra.mxu0 0
    %179 = vmatprep.subr.bf16.mxu0 0
    %180 = vmatpush1.bf16.msra.mxu0 0
    %181 = vmatprep.subr.bf16.mxu0 0
    %182 = vmatpush1.bf16.msra.mxu0 %v161
    %183 = vmatprep.subr.bf16.mxu0 0
    %184 = vmatpush1.bf16.msra.mxu0 %v160
    %185 = vmatprep.subr.bf16.mxu0 0
    %186 = vmatpush1.bf16.msra.mxu0 %v159
    %187 = vmatprep.subr.bf16.mxu0 0
    %188 = vmatpush1.bf16.msra.mxu0 %v158
    %189 = vmatprep.subr.bf16.mxu0 0
    %190 = vmatpush2.bf16.msra.mxu0 0
    %191 = vmatprep.subr.bf16.mxu0 0
    %192 = vmatpush2.bf16.msra.mxu0 0
    %193 = vmatprep.subr.bf16.mxu0 0
    %194 = vmatpush2.bf16.msra.mxu0 0
    %195 = vmatprep.subr.bf16.mxu0 0
    %196 = vmatpush2.bf16.msra.mxu0 0
    %197 = vmatprep.subr.bf16.mxu0 0
    %198 = vmatpush2.bf16.msra.mxu0 0
    %199 = vmatprep.subr.bf16.mxu0 0
    %200 = vmatpush2.bf16.msra.mxu0 0
    %201 = vmatprep.subr.bf16.mxu0 0
    %202 = vmatpush2.bf16.msra.mxu0 0
    %203 = vmatprep.subr.bf16.mxu0 0
    %204 = vmatpush2.bf16.msra.mxu0 0
    %205 = vmatprep.mubr.bf16.mxu0 0
    %206 = vmatmul.mubr.bf16.gmra.mxu0 %v168
    %v207 = vpop.f32.mrf.mxu0
    %v208 = vadd.f32 %v130, %v207
    %v209 = vpop.f32.mrf.mxu0
    %v210 = vpop.f32.mrf.mxu0
    %v211 = vadd.f32 %v130, %v210
    %v212 = vpop.f32.mrf.mxu0
    %213 = vmatprep.mubr.bf16.mxu0 0
    %214 = vmatmul.mubr.bf16.gmra.mxu0 %v171
    %v215 = vpop.f32.mrf.mxu0
    %v216 = vadd.f32 %v130, %v215
    %v217 = vpop.f32.mrf.mxu0
    %v218 = vpop.f32.mrf.mxu0
    %v219 = vadd.f32 %v130, %v218
    %v220 = vpop.f32.mrf.mxu0
    %221 = vdwg.mxu0
    %v222 = vmax.f32 %v208, 0.0
    %v223 = vmax.f32 %v211, 0.0
    %v224 = vmax.f32 %v216, 0.0
    %v225 = vmax.f32 %v219, 0.0
    %v226 = vpack.c.bf16 %v223, %v222
    %v227 = vpack.c.bf16 %v225, %v224
    %v228 = vld [vmem:[#allocation2] sm:$0xf]
    %v229 = vld [vmem:[#allocation2 + $0x4] sm:$0xf]
    %v230 = vld [vmem:[#allocation2 + $0x8] sm:$0xf]
    %v231 = vld [vmem:[#allocation2 + $0xc] sm:$0xf]
    %v232 = vld [vmem:[#allocation2 + $0x10] sm:$0xf]
    %v233 = vld [vmem:[#allocation2 + $0x14] sm:$0xf]
    %v234 = vld [vmem:[#allocation2 + $0x18] sm:$0xf]
    %v235 = vld [vmem:[#allocation2 + $0x1c] sm:$0xf]
    %v236 = vld [vmem:[#allocation2 + $0x20] sm:$0xf]
    %v237 = vld [vmem:[#allocation2 + $0x24] sm:$0xf]
    %v238 = vld [vmem:[#allocation2 + $0x28] sm:$0xf]
    %v239 = vld [vmem:[#allocation2 + $0x2c] sm:$0xf]
    %v240 = vld [vmem:[#allocation2 + $0x30] sm:$0xf]
    %v241 = vld [vmem:[#allocation2 + $0x34] sm:$0xf]
    %v242 = vld [vmem:[#allocation2 + $0x38] sm:$0xf]
    %v243 = vld [vmem:[#allocation2 + $0x3c] sm:$0xf]
    %v244 = vld [vmem:[%s5] sm:$0x1]
    %v246 = vlaneseq
    %v247 = vshrl.u32 %v246, 7
    %v248 = vsub.s32 0, %v247
    %v249 = vrot.slane %v244, %v248
    %v267 = vunpack.c.l.b16 %v228
    %v268 = vunpack.c.l.b16 %v229
    %v269 = vunpack.c.l.b16 %v230
    %v270 = vunpack.c.l.b16 %v231
    %v271 = vunpack.c.l.b16 %v232
    %v272 = vunpack.c.l.b16 %v233
    %v273 = vunpack.c.l.b16 %v234
    %v274 = vunpack.c.l.b16 %v235
    %v275 = vunpack.c.l.b16 %v236
    %v276 = vunpack.c.l.b16 %v237
    %v277 = vunpack.c.l.b16 %v238
    %v278 = vunpack.c.l.b16 %v239
    %v279 = vunpack.c.l.b16 %v240
    %v280 = vunpack.c.l.b16 %v241
    %v281 = vunpack.c.l.b16 %v242
    %v282 = vunpack.c.l.b16 %v243
    %v283 = vpack.c.b16 %v268, %v267
    %v284 = vpack.c.b16 %v270, %v269
    %v285 = vpack.c.b16 %v272, %v271
    %v286 = vpack.c.b16 %v274, %v273
    %v287 = vpack.c.b16 %v276, %v275
    %v288 = vpack.c.b16 %v278, %v277
    %v289 = vpack.c.b16 %v280, %v279
    %v290 = vpack.c.b16 %v282, %v281
    %299 = vmatprep.subr.bf16.mxu0 0
    %300 = vmatpush1.bf16.msra.mxu0 %v290
    %301 = vmatprep.subr.bf16.mxu0 0
    %302 = vmatpush1.bf16.msra.mxu0 %v289
    %303 = vmatprep.subr.bf16.mxu0 0
    %304 = vmatpush1.bf16.msra.mxu0 %v288
    %305 = vmatprep.subr.bf16.mxu0 0
    %306 = vmatpush1.bf16.msra.mxu0 %v287
    %307 = vmatprep.subr.bf16.mxu0 0
    %308 = vmatpush1.bf16.msra.mxu0 %v286
    %309 = vmatprep.subr.bf16.mxu0 0
    %310 = vmatpush1.bf16.msra.mxu0 %v285
    %311 = vmatprep.subr.bf16.mxu0 0
    %312 = vmatpush1.bf16.msra.mxu0 %v284
    %313 = vmatprep.subr.bf16.mxu0 0
    %314 = vmatpush1.bf16.msra.mxu0 %v283
    %315 = vmatprep.subr.bf16.mxu0 0
    %316 = vmatpush2.bf16.msra.mxu0 0
    %317 = vmatprep.subr.bf16.mxu0 0
    %318 = vmatpush2.bf16.msra.mxu0 0
    %319 = vmatprep.subr.bf16.mxu0 0
    %320 = vmatpush2.bf16.msra.mxu0 0
    %321 = vmatprep.subr.bf16.mxu0 0
    %322 = vmatpush2.bf16.msra.mxu0 0
    %323 = vmatprep.subr.bf16.mxu0 0
    %324 = vmatpush2.bf16.msra.mxu0 0
    %325 = vmatprep.subr.bf16.mxu0 0
    %326 = vmatpush2.bf16.msra.mxu0 0
    %327 = vmatprep.subr.bf16.mxu0 0
    %328 = vmatpush2.bf16.msra.mxu0 0
    %329 = vmatprep.subr.bf16.mxu0 0
    %330 = vmatpush2.bf16.msra.mxu0 0
    %331 = vmatprep.mubr.bf16.mxu0 0
    %332 = vmatmul.mubr.bf16.gmra.mxu0 %v226
    %v333 = vpop.f32.mrf.mxu0
    %v334 = vadd.f32 %v249, %v333
    %v335 = vpop.f32.mrf.mxu0
    %v336 = vpop.f32.mrf.mxu0
    %v337 = vadd.f32 %v249, %v336
    %v338 = vpop.f32.mrf.mxu0
    %339 = vmatprep.mubr.bf16.mxu0 0
    %340 = vmatmul.mubr.bf16.gmra.mxu0 %v227
    %v341 = vpop.f32.mrf.mxu0
    %v342 = vadd.f32 %v249, %v341
    %v343 = vpop.f32.mrf.mxu0
    %v344 = vpop.f32.mrf.mxu0
    %v345 = vadd.f32 %v249, %v344
    %v346 = vpop.f32.mrf.mxu0
    %347 = vdwg.mxu0
    %v348 = vmax.f32 %v334, 0.0
    %v349 = vmax.f32 %v337, 0.0
    %v350 = vmax.f32 %v342, 0.0
    %v351 = vmax.f32 %v345, 0.0
    %v352 = vpack.c.bf16 %v349, %v348
    %v353 = vpack.c.bf16 %v351, %v350
    %v354 = vld [vmem:[#allocation5] sm:$0xf]
    %v355 = vld [vmem:[#allocation5 + $0x4] sm:$0xf]
    %v356 = vld [vmem:[#allocation5 + $0x8] sm:$0xf]
    %v357 = vld [vmem:[#allocation5 + $0xc] sm:$0xf]
    %v358 = vld [vmem:[#allocation5 + $0x10] sm:$0xf]
    %v359 = vld [vmem:[#allocation5 + $0x14] sm:$0xf]
    %v360 = vld [vmem:[#allocation5 + $0x18] sm:$0xf]
    %v361 = vld [vmem:[#allocation5 + $0x1c] sm:$0xf]
    %v362 = vld [vmem:[#allocation5 + $0x20] sm:$0xf]
    %v363 = vld [vmem:[#allocation5 + $0x24] sm:$0xf]
    %v364 = vld [vmem:[#allocation5 + $0x28] sm:$0xf]
    %v365 = vld [vmem:[#allocation5 + $0x2c] sm:$0xf]
    %v366 = vld [vmem:[#allocation5 + $0x30] sm:$0xf]
    %v367 = vld [vmem:[#allocation5 + $0x34] sm:$0xf]
    %v368 = vld [vmem:[#allocation5 + $0x38] sm:$0xf]
    %v369 = vld [vmem:[#allocation5 + $0x3c] sm:$0xf]
    %v370 = vld [vmem:[%s7] sm:$0x1]
    %v372 = vlaneseq
    %v373 = vshrl.u32 %v372, 7
    %v374 = vsub.s32 0, %v373
    %v375 = vrot.slane %v370, %v374
    %v393 = vunpack.c.l.b16 %v354
    %v394 = vunpack.c.l.b16 %v355
    %v395 = vunpack.c.l.b16 %v356
    %v396 = vunpack.c.l.b16 %v357
    %v397 = vunpack.c.l.b16 %v358
    %v398 = vunpack.c.l.b16 %v359
    %v399 = vunpack.c.l.b16 %v360
    %v400 = vunpack.c.l.b16 %v361
    %v401 = vunpack.c.l.b16 %v362
    %v402 = vunpack.c.l.b16 %v363
    %v403 = vunpack.c.l.b16 %v364
    %v404 = vunpack.c.l.b16 %v365
    %v405 = vunpack.c.l.b16 %v366
    %v406 = vunpack.c.l.b16 %v367
    %v407 = vunpack.c.l.b16 %v368
    %v408 = vunpack.c.l.b16 %v369
    %v409 = vpack.c.b16 %v394, %v393
    %v410 = vpack.c.b16 %v396, %v395
    %v411 = vpack.c.b16 %v398, %v397
    %v412 = vpack.c.b16 %v400, %v399
    %v413 = vpack.c.b16 %v402, %v401
    %v414 = vpack.c.b16 %v404, %v403
    %v415 = vpack.c.b16 %v406, %v405
    %v416 = vpack.c.b16 %v408, %v407
    %425 = vmatprep.subr.bf16.mxu0 0
    %426 = vmatpush1.bf16.msra.mxu0 %v416
    %427 = vmatprep.subr.bf16.mxu0 0
    %428 = vmatpush1.bf16.msra.mxu0 %v415
    %429 = vmatprep.subr.bf16.mxu0 0
    %430 = vmatpush1.bf16.msra.mxu0 %v414
    %431 = vmatprep.subr.bf16.mxu0 0
    %432 = vmatpush1.bf16.msra.mxu0 %v413
    %433 = vmatprep.subr.bf16.mxu0 0
    %434 = vmatpush1.bf16.msra.mxu0 %v412
    %435 = vmatprep.subr.bf16.mxu0 0
    %436 = vmatpush1.bf16.msra.mxu0 %v411
    %437 = vmatprep.subr.bf16.mxu0 0
    %438 = vmatpush1.bf16.msra.mxu0 %v410
    %439 = vmatprep.subr.bf16.mxu0 0
    %440 = vmatpush1.bf16.msra.mxu0 %v409
    %441 = vmatprep.subr.bf16.mxu0 0
    %442 = vmatpush2.bf16.msra.mxu0 0
    %443 = vmatprep.subr.bf16.mxu0 0
    %444 = vmatpush2.bf16.msra.mxu0 0
    %445 = vmatprep.subr.bf16.mxu0 0
    %446 = vmatpush2.bf16.msra.mxu0 0
    %447 = vmatprep.subr.bf16.mxu0 0
    %448 = vmatpush2.bf16.msra.mxu0 0
    %449 = vmatprep.subr.bf16.mxu0 0
    %450 = vmatpush2.bf16.msra.mxu0 0
    %451 = vmatprep.subr.bf16.mxu0 0
    %452 = vmatpush2.bf16.msra.mxu0 0
    %453 = vmatprep.subr.bf16.mxu0 0
    %454 = vmatpush2.bf16.msra.mxu0 0
    %455 = vmatprep.subr.bf16.mxu0 0
    %456 = vmatpush2.bf16.msra.mxu0 0
    %457 = vmatprep.mubr.bf16.mxu0 0
    %458 = vmatmul.mubr.bf16.gmra.mxu0 %v352
    %v459 = vpop.f32.mrf.mxu0
    %v460 = vadd.f32 %v375, %v459
    %v461 = vpop.f32.mrf.mxu0
    %v462 = vpop.f32.mrf.mxu0
    %v463 = vadd.f32 %v375, %v462
    %v464 = vpop.f32.mrf.mxu0
    %465 = vmatprep.mubr.bf16.mxu0 0
    %466 = vmatmul.mubr.bf16.gmra.mxu0 %v353
    %v467 = vpop.f32.mrf.mxu0
    %v468 = vadd.f32 %v375, %v467
    %v469 = vpop.f32.mrf.mxu0
    %v470 = vpop.f32.mrf.mxu0
    %v471 = vadd.f32 %v375, %v470
    %v472 = vpop.f32.mrf.mxu0
    %473 = vdwg.mxu0
    %v474 = vmax.f32 %v460, 0.0
    %v475 = vmax.f32 %v463, 0.0
    %v476 = vmax.f32 %v468, 0.0
    %v477 = vmax.f32 %v471, 0.0
    %v478 = vpack.c.bf16 %v475, %v474
    %v479 = vpack.c.bf16 %v477, %v476
    %v480 = vld [vmem:[#allocation7] sm:$0xf]
    %v481 = vld [vmem:[#allocation7 + $0x4] sm:$0xf]
    %v482 = vld [vmem:[#allocation7 + $0x8] sm:$0xf]
    %v483 = vld [vmem:[#allocation7 + $0xc] sm:$0xf]
    %v484 = vld [vmem:[#allocation7 + $0x10] sm:$0xf]
    %v485 = vld [vmem:[#allocation7 + $0x14] sm:$0xf]
    %v486 = vld [vmem:[#allocation7 + $0x18] sm:$0xf]
    %v487 = vld [vmem:[#allocation7 + $0x1c] sm:$0xf]
    %v488 = vld [vmem:[#allocation7 + $0x20] sm:$0xf]
    %v489 = vld [vmem:[#allocation7 + $0x24] sm:$0xf]
    %v490 = vld [vmem:[#allocation7 + $0x28] sm:$0xf]
    %v491 = vld [vmem:[#allocation7 + $0x2c] sm:$0xf]
    %v492 = vld [vmem:[#allocation7 + $0x30] sm:$0xf]
    %v493 = vld [vmem:[#allocation7 + $0x34] sm:$0xf]
    %v494 = vld [vmem:[#allocation7 + $0x38] sm:$0xf]
    %v495 = vld [vmem:[#allocation7 + $0x3c] sm:$0xf]
    %v496 = vld [vmem:[%s9] sm:$0x1]
    %v498 = vlaneseq
    %v499 = vshrl.u32 %v498, 7
    %v500 = vsub.s32 0, %v499
    %v501 = vrot.slane %v496, %v500
    %v519 = vunpack.c.l.b16 %v480
    %v520 = vunpack.c.l.b16 %v481
    %v521 = vunpack.c.l.b16 %v482
    %v522 = vunpack.c.l.b16 %v483
    %v523 = vunpack.c.l.b16 %v484
    %v524 = vunpack.c.l.b16 %v485
    %v525 = vunpack.c.l.b16 %v486
    %v526 = vunpack.c.l.b16 %v487
    %v527 = vunpack.c.l.b16 %v488
    %v528 = vunpack.c.l.b16 %v489
    %v529 = vunpack.c.l.b16 %v490
    %v530 = vunpack.c.l.b16 %v491
    %v531 = vunpack.c.l.b16 %v492
    %v532 = vunpack.c.l.b16 %v493
    %v533 = vunpack.c.l.b16 %v494
    %v534 = vunpack.c.l.b16 %v495
    %v535 = vpack.c.b16 %v520, %v519
    %v536 = vpack.c.b16 %v522, %v521
    %v537 = vpack.c.b16 %v524, %v523
    %v538 = vpack.c.b16 %v526, %v525
    %v539 = vpack.c.b16 %v528, %v527
    %v540 = vpack.c.b16 %v530, %v529
    %v541 = vpack.c.b16 %v532, %v531
    %v542 = vpack.c.b16 %v534, %v533
    %551 = vmatprep.subr.bf16.mxu0 0
    %552 = vmatpush1.bf16.msra.mxu0 %v542
    %553 = vmatprep.subr.bf16.mxu0 0
    %554 = vmatpush1.bf16.msra.mxu0 %v541
    %555 = vmatprep.subr.bf16.mxu0 0
    %556 = vmatpush1.bf16.msra.mxu0 %v540
    %557 = vmatprep.subr.bf16.mxu0 0
    %558 = vmatpush1.bf16.msra.mxu0 %v539
    %559 = vmatprep.subr.bf16.mxu0 0
    %560 = vmatpush1.bf16.msra.mxu0 %v538
    %561 = vmatprep.subr.bf16.mxu0 0
    %562 = vmatpush1.bf16.msra.mxu0 %v537
    %563 = vmatprep.subr.bf16.mxu0 0
    %564 = vmatpush1.bf16.msra.mxu0 %v536
    %565 = vmatprep.subr.bf16.mxu0 0
    %566 = vmatpush1.bf16.msra.mxu0 %v535
    %567 = vmatprep.subr.bf16.mxu0 0
    %568 = vmatpush2.bf16.msra.mxu0 0
    %569 = vmatprep.subr.bf16.mxu0 0
    %570 = vmatpush2.bf16.msra.mxu0 0
    %571 = vmatprep.subr.bf16.mxu0 0
    %572 = vmatpush2.bf16.msra.mxu0 0
    %573 = vmatprep.subr.bf16.mxu0 0
    %574 = vmatpush2.bf16.msra.mxu0 0
    %575 = vmatprep.subr.bf16.mxu0 0
    %576 = vmatpush2.bf16.msra.mxu0 0
    %577 = vmatprep.subr.bf16.mxu0 0
    %578 = vmatpush2.bf16.msra.mxu0 0
    %579 = vmatprep.subr.bf16.mxu0 0
    %580 = vmatpush2.bf16.msra.mxu0 0
    %581 = vmatprep.subr.bf16.mxu0 0
    %582 = vmatpush2.bf16.msra.mxu0 0
    %583 = vmatprep.mubr.bf16.mxu0 0
    %584 = vmatmul.mubr.bf16.gmra.mxu0 %v478
    %v585 = vpop.f32.mrf.mxu0
    %v586 = vadd.f32 %v501, %v585
    %v587 = vpop.f32.mrf.mxu0
    %v588 = vpop.f32.mrf.mxu0
    %v589 = vadd.f32 %v501, %v588
    %v590 = vpop.f32.mrf.mxu0
    %591 = vmatprep.mubr.bf16.mxu0 0
    %592 = vmatmul.mubr.bf16.gmra.mxu0 %v479
    %v593 = vpop.f32.mrf.mxu0
    %v594 = vadd.f32 %v501, %v593
    %v595 = vpop.f32.mrf.mxu0
    %v596 = vpop.f32.mrf.mxu0
    %v597 = vadd.f32 %v501, %v596
    %v598 = vpop.f32.mrf.mxu0
    %599 = vdwg.mxu0
    %v600 = vmul.f32 %v586, %v586
    %v601 = vmul.f32 %v589, %v589
    %v602 = vmul.f32 %v594, %v594
    %v603 = vmul.f32 %v597, %v597
    %604 = vadd.xlane.f32.xlu0 %v600
    %v605 = vpop.xlane.xlu0 %604
    %606 = vadd.xlane.f32.xlu0 %v601
    %v607 = vpop.xlane.xlu0 %606
    %608 = vadd.xlane.f32.xlu0 %v602
    %v609 = vpop.xlane.xlu0 %608
    %610 = vadd.xlane.f32.xlu0 %v603
    %v611 = vpop.xlane.xlu0 %610
    %v612 = vmax.f32 %v605, 1e-24
    %v613 = vmax.f32 %v607, 1e-24
    %v614 = vmax.f32 %v609, 1e-24
    %v615 = vmax.f32 %v611, 1e-24
    %v616 = vrsqrt.pop %v612
    %v617 = vrsqrt.pop %v613
    %v618 = vrsqrt.pop %v614
    %v619 = vrsqrt.pop %v615
    %v620 = vmul.f32 %v586, %v616
    %v621 = vmul.f32 %v589, %v617
    %v622 = vmul.f32 %v594, %v618
    %v623 = vmul.f32 %v597, %v619
    %624 = vst [vmem:[#allocation10] sm:$0xff] %v620
    %625 = vst [vmem:[#allocation10 + $0x8] sm:$0xff] %v621
    %626 = vst [vmem:[#allocation10 + $0x10] sm:$0xff] %v622
    %627 = vst [vmem:[#allocation10 + $0x18] sm:$0xff] %v623
    %v628 = vld [vmem:[%s1] sm:$0xf]
    %v629 = vld [vmem:[%s1 + $0x4] sm:$0xf]
    %v630 = vld [vmem:[%s1 + $0x8] sm:$0xf]
    %v631 = vld [vmem:[%s1 + $0xc] sm:$0xf]
    %v632 = vld [vmem:[%s10] sm:$0xf]
    %v633 = vld [vmem:[%s10 + $0x4] sm:$0xf]
    %v634 = vld [vmem:[%s10 + $0x8] sm:$0xf]
    %v635 = vld [vmem:[%s10 + $0xc] sm:$0xf]
    %v636 = vld [vmem:[%s11] sm:$0x1]
    %v638 = vlaneseq
    %v639 = vshrl.u32 %v638, 7
    %v640 = vsub.s32 0, %v639
    %v641 = vrot.slane %v636, %v640
    %v647 = vunpack.c.l.b16 %v628
    %v648 = vunpack.c.l.b16 %v629
    %v649 = vunpack.c.l.b16 %v630
    %v650 = vunpack.c.l.b16 %v631
    %v651 = vpack.c.b16 %v648, %v647
    %v652 = vpack.c.b16 %v650, %v649
    %v657 = vunpack.c.l.b16 %v632
    %v658 = vunpack.c.l.b16 %v633
    %v659 = vunpack.c.l.b16 %v634
    %v660 = vunpack.c.l.b16 %v635
    %v661 = vpack.c.b16 %v658, %v657
    %v662 = vpack.c.b16 %v660, %v659
    %vm665 = vcmask 261120
    %v667 = vsel %vm665, %v651, 0
    %v670 = vsel %vm665, %v652, 0
    %672 = vmatprep.subr.bf16.mxu0 0
    %673 = vmatpush1.bf16.msra.mxu0 0
    %674 = vmatprep.subr.bf16.mxu0 0
    %675 = vmatpush1.bf16.msra.mxu0 0
    %676 = vmatprep.subr.bf16.mxu0 0
    %677 = vmatpush1.bf16.msra.mxu0 0
    %678 = vmatprep.subr.bf16.mxu0 0
    %679 = vmatpush1.bf16.msra.mxu0 0
    %680 = vmatprep.subr.bf16.mxu0 0
    %681 = vmatpush1.bf16.msra.mxu0 0
    %682 = vmatprep.subr.bf16.mxu0 0
    %683 = vmatpush1.bf16.msra.mxu0 0
    %684 = vmatprep.subr.bf16.mxu0 0
    %685 = vmatpush1.bf16.msra.mxu0 %v662
    %686 = vmatprep.subr.bf16.mxu0 0
    %687 = vmatpush1.bf16.msra.mxu0 %v661
    %688 = vmatprep.subr.bf16.mxu0 0
    %689 = vmatpush2.bf16.msra.mxu0 0
    %690 = vmatprep.subr.bf16.mxu0 0
    %691 = vmatpush2.bf16.msra.mxu0 0
    %692 = vmatprep.subr.bf16.mxu0 0
    %693 = vmatpush2.bf16.msra.mxu0 0
    %694 = vmatprep.subr.bf16.mxu0 0
    %695 = vmatpush2.bf16.msra.mxu0 0
    %696 = vmatprep.subr.bf16.mxu0 0
    %697 = vmatpush2.bf16.msra.mxu0 0
    %698 = vmatprep.subr.bf16.mxu0 0
    %699 = vmatpush2.bf16.msra.mxu0 0
    %700 = vmatprep.subr.bf16.mxu0 0
    %701 = vmatpush2.bf16.msra.mxu0 0
    %702 = vmatprep.subr.bf16.mxu0 0
    %703 = vmatpush2.bf16.msra.mxu0 0
    %704 = vmatprep.mubr.bf16.mxu0 0
    %705 = vmatmul.mubr.bf16.gmra.mxu0 %v667
    %v706 = vpop.f32.mrf.mxu0
    %v707 = vadd.f32 %v641, %v706
    %v708 = vpop.f32.mrf.mxu0
    %v709 = vpop.f32.mrf.mxu0
    %v710 = vadd.f32 %v641, %v709
    %v711 = vpop.f32.mrf.mxu0
    %712 = vmatprep.mubr.bf16.mxu0 0
    %713 = vmatmul.mubr.bf16.gmra.mxu0 %v670
    %v714 = vpop.f32.mrf.mxu0
    %v715 = vadd.f32 %v641, %v714
    %v716 = vpop.f32.mrf.mxu0
    %v717 = vpop.f32.mrf.mxu0
    %v718 = vadd.f32 %v641, %v717
    %v719 = vpop.f32.mrf.mxu0
    %720 = vdwg.mxu0
    %v721 = vmax.f32 %v707, 0.0
    %v722 = vmax.f32 %v710, 0.0
    %v723 = vmax.f32 %v715, 0.0
    %v724 = vmax.f32 %v718, 0.0
    %v725 = vpack.c.bf16 %v722, %v721
    %v726 = vpack.c.bf16 %v724, %v723
    %v727 = vld [vmem:[#allocation8] sm:$0xf]
    %v728 = vld [vmem:[#allocation8 + $0x4] sm:$0xf]
    %v729 = vld [vmem:[#allocation8 + $0x8] sm:$0xf]
    %v730 = vld [vmem:[#allocation8 + $0xc] sm:$0xf]
    %v731 = vld [vmem:[#allocation8 + $0x10] sm:$0xf]
    %v732 = vld [vmem:[#allocation8 + $0x14] sm:$0xf]
    %v733 = vld [vmem:[#allocation8 + $0x18] sm:$0xf]
    %v734 = vld [vmem:[#allocation8 + $0x1c] sm:$0xf]
    %v735 = vld [vmem:[#allocation8 + $0x20] sm:$0xf]
    %v736 = vld [vmem:[#allocation8 + $0x24] sm:$0xf]
    %v737 = vld [vmem:[#allocation8 + $0x28] sm:$0xf]
    %v738 = vld [vmem:[#allocation8 + $0x2c] sm:$0xf]
    %v739 = vld [vmem:[#allocation8 + $0x30] sm:$0xf]
    %v740 = vld [vmem:[#allocation8 + $0x34] sm:$0xf]
    %v741 = vld [vmem:[#allocation8 + $0x38] sm:$0xf]
    %v742 = vld [vmem:[#allocation8 + $0x3c] sm:$0xf]
    %v743 = vld [vmem:[%s13] sm:$0x1]
    %v745 = vlaneseq
    %v746 = vshrl.u32 %v745, 7
    %v747 = vsub.s32 0, %v746
    %v748 = vrot.slane %v743, %v747
    %v766 = vunpack.c.l.b16 %v727
    %v767 = vunpack.c.l.b16 %v728
    %v768 = vunpack.c.l.b16 %v729
    %v769 = vunpack.c.l.b16 %v730
    %v770 = vunpack.c.l.b16 %v731
    %v771 = vunpack.c.l.b16 %v732
    %v772 = vunpack.c.l.b16 %v733
    %v773 = vunpack.c.l.b16 %v734
    %v774 = vunpack.c.l.b16 %v735
    %v775 = vunpack.c.l.b16 %v736
    %v776 = vunpack.c.l.b16 %v737
    %v777 = vunpack.c.l.b16 %v738
    %v778 = vunpack.c.l.b16 %v739
    %v779 = vunpack.c.l.b16 %v740
    %v780 = vunpack.c.l.b16 %v741
    %v781 = vunpack.c.l.b16 %v742
    %v782 = vpack.c.b16 %v767, %v766
    %v783 = vpack.c.b16 %v769, %v768
    %v784 = vpack.c.b16 %v771, %v770
    %v785 = vpack.c.b16 %v773, %v772
    %v786 = vpack.c.b16 %v775, %v774
    %v787 = vpack.c.b16 %v777, %v776
    %v788 = vpack.c.b16 %v779, %v778
    %v789 = vpack.c.b16 %v781, %v780
    %798 = vmatprep.subr.bf16.mxu0 0
    %799 = vmatpush1.bf16.msra.mxu0 %v789
    %800 = vmatprep.subr.bf16.mxu0 0
    %801 = vmatpush1.bf16.msra.mxu0 %v788
    %802 = vmatprep.subr.bf16.mxu0 0
    %803 = vmatpush1.bf16.msra.mxu0 %v787
    %804 = vmatprep.subr.bf16.mxu0 0
    %805 = vmatpush1.bf16.msra.mxu0 %v786
    %806 = vmatprep.subr.bf16.mxu0 0
    %807 = vmatpush1.bf16.msra.mxu0 %v785
    %808 = vmatprep.subr.bf16.mxu0 0
    %809 = vmatpush1.bf16.msra.mxu0 %v784
    %810 = vmatprep.subr.bf16.mxu0 0
    %811 = vmatpush1.bf16.msra.mxu0 %v783
    %812 = vmatprep.subr.bf16.mxu0 0
    %813 = vmatpush1.bf16.msra.mxu0 %v782
    %814 = vmatprep.subr.bf16.mxu0 0
    %815 = vmatpush2.bf16.msra.mxu0 0
    %816 = vmatprep.subr.bf16.mxu0 0
    %817 = vmatpush2.bf16.msra.mxu0 0
    %818 = vmatprep.subr.bf16.mxu0 0
    %819 = vmatpush2.bf16.msra.mxu0 0
    %820 = vmatprep.subr.bf16.mxu0 0
    %821 = vmatpush2.bf16.msra.mxu0 0
    %822 = vmatprep.subr.bf16.mxu0 0
    %823 = vmatpush2.bf16.msra.mxu0 0
    %824 = vmatprep.subr.bf16.mxu0 0
    %825 = vmatpush2.bf16.msra.mxu0 0
    %826 = vmatprep.subr.bf16.mxu0 0
    %827 = vmatpush2.bf16.msra.mxu0 0
    %828 = vmatprep.subr.bf16.mxu0 0
    %829 = vmatpush2.bf16.msra.mxu0 0
    %830 = vmatprep.mubr.bf16.mxu0 0
    %831 = vmatmul.mubr.bf16.gmra.mxu0 %v725
    %v832 = vpop.f32.mrf.mxu0
    %v833 = vadd.f32 %v748, %v832
    %v834 = vpop.f32.mrf.mxu0
    %v835 = vpop.f32.mrf.mxu0
    %v836 = vadd.f32 %v748, %v835
    %v837 = vpop.f32.mrf.mxu0
    %838 = vmatprep.mubr.bf16.mxu0 0
    %839 = vmatmul.mubr.bf16.gmra.mxu0 %v726
    %v840 = vpop.f32.mrf.mxu0
    %v841 = vadd.f32 %v748, %v840
    %v842 = vpop.f32.mrf.mxu0
    %v843 = vpop.f32.mrf.mxu0
    %v844 = vadd.f32 %v748, %v843
    %v845 = vpop.f32.mrf.mxu0
    %846 = vdwg.mxu0
    %v847 = vmax.f32 %v833, 0.0
    %v848 = vmax.f32 %v836, 0.0
    %v849 = vmax.f32 %v841, 0.0
    %v850 = vmax.f32 %v844, 0.0
    %v851 = vpack.c.bf16 %v848, %v847
    %v852 = vpack.c.bf16 %v850, %v849
    %v853 = vld [vmem:[%s14] sm:$0xf]
    %v854 = vld [vmem:[%s14 + $0x4] sm:$0xf]
    %v855 = vld [vmem:[%s14 + $0x8] sm:$0xf]
    %v856 = vld [vmem:[%s14 + $0xc] sm:$0xf]
    %v857 = vld [vmem:[%s14 + $0x10] sm:$0xf]
    %v858 = vld [vmem:[%s14 + $0x14] sm:$0xf]
    %v859 = vld [vmem:[%s14 + $0x18] sm:$0xf]
    %v860 = vld [vmem:[%s14 + $0x1c] sm:$0xf]
    %v861 = vld [vmem:[%s14 + $0x20] sm:$0xf]
    %v862 = vld [vmem:[%s14 + $0x24] sm:$0xf]
    %v863 = vld [vmem:[%s14 + $0x28] sm:$0xf]
    %v864 = vld [vmem:[%s14 + $0x2c] sm:$0xf]
    %v865 = vld [vmem:[%s14 + $0x30] sm:$0xf]
    %v866 = vld [vmem:[%s14 + $0x34] sm:$0xf]
    %v867 = vld [vmem:[%s14 + $0x38] sm:$0xf]
    %v868 = vld [vmem:[%s14 + $0x3c] sm:$0xf]
    %v869 = vld [vmem:[%s15] sm:$0x1]
    %v871 = vlaneseq
    %v872 = vshrl.u32 %v871, 7
    %v873 = vsub.s32 0, %v872
    %v874 = vrot.slane %v869, %v873
    %v892 = vunpack.c.l.b16 %v853
    %v893 = vunpack.c.l.b16 %v854
    %v894 = vunpack.c.l.b16 %v855
    %v895 = vunpack.c.l.b16 %v856
    %v896 = vunpack.c.l.b16 %v857
    %v897 = vunpack.c.l.b16 %v858
    %v898 = vunpack.c.l.b16 %v859
    %v899 = vunpack.c.l.b16 %v860
    %v900 = vunpack.c.l.b16 %v861
    %v901 = vunpack.c.l.b16 %v862
    %v902 = vunpack.c.l.b16 %v863
    %v903 = vunpack.c.l.b16 %v864
    %v904 = vunpack.c.l.b16 %v865
    %v905 = vunpack.c.l.b16 %v866
    %v906 = vunpack.c.l.b16 %v867
    %v907 = vunpack.c.l.b16 %v868
    %v908 = vpack.c.b16 %v893, %v892
    %v909 = vpack.c.b16 %v895, %v894
    %v910 = vpack.c.b16 %v897, %v896
    %v911 = vpack.c.b16 %v899, %v898
    %v912 = vpack.c.b16 %v901, %v900
    %v913 = vpack.c.b16 %v903, %v902
    %v914 = vpack.c.b16 %v905, %v904
    %v915 = vpack.c.b16 %v907, %v906
    %924 = vmatprep.subr.bf16.mxu0 0
    %925 = vmatpush1.bf16.msra.mxu0 %v915
    %926 = vmatprep.subr.bf16.mxu0 0
    %927 = vmatpush1.bf16.msra.mxu0 %v914
    %928 = vmatprep.subr.bf16.mxu0 0
    %929 = vmatpush1.bf16.msra.mxu0 %v913
    %930 = vmatprep.subr.bf16.mxu0 0
    %931 = vmatpush1.bf16.msra.mxu0 %v912
    %932 = vmatprep.subr.bf16.mxu0 0
    %933 = vmatpush1.bf16.msra.mxu0 %v911
    %934 = vmatprep.subr.bf16.mxu0 0
    %935 = vmatpush1.bf16.msra.mxu0 %v910
    %936 = vmatprep.subr.bf16.mxu0 0
    %937 = vmatpush1.bf16.msra.mxu0 %v909
    %938 = vmatprep.subr.bf16.mxu0 0
    %939 = vmatpush1.bf16.msra.mxu0 %v908
    %940 = vmatprep.subr.bf16.mxu0 0
    %941 = vmatpush2.bf16.msra.mxu0 0
    %942 = vmatprep.subr.bf16.mxu0 0
    %943 = vmatpush2.bf16.msra.mxu0 0
    %944 = vmatprep.subr.bf16.mxu0 0
    %945 = vmatpush2.bf16.msra.mxu0 0
    %946 = vmatprep.subr.bf16.mxu0 0
    %947 = vmatpush2.bf16.msra.mxu0 0
    %948 = vmatprep.subr.bf16.mxu0 0
    %949 = vmatpush2.bf16.msra.mxu0 0
    %950 = vmatprep.subr.bf16.mxu0 0
    %951 = vmatpush2.bf16.msra.mxu0 0
    %952 = vmatprep.subr.bf16.mxu0 0
    %953 = vmatpush2.bf16.msra.mxu0 0
    %954 = vmatprep.subr.bf16.mxu0 0
    %955 = vmatpush2.bf16.msra.mxu0 0
    %956 = vmatprep.mubr.bf16.mxu0 0
    %957 = vmatmul.mubr.bf16.gmra.mxu0 %v851
    %v958 = vpop.f32.mrf.mxu0
    %v959 = vadd.f32 %v874, %v958
    %v960 = vpop.f32.mrf.mxu0
    %v961 = vpop.f32.mrf.mxu0
    %v962 = vadd.f32 %v874, %v961
    %v963 = vpop.f32.mrf.mxu0
    %964 = vmatprep.mubr.bf16.mxu0 0
    %965 = vmatmul.mubr.bf16.gmra.mxu0 %v852
    %v966 = vpop.f32.mrf.mxu0
    %v967 = vadd.f32 %v874, %v966
    %v968 = vpop.f32.mrf.mxu0
    %v969 = vpop.f32.mrf.mxu0
    %v970 = vadd.f32 %v874, %v969
    %v971 = vpop.f32.mrf.mxu0
    %972 = vdwg.mxu0
    %v973 = vmul.f32 %v959, %v959
    %v974 = vmul.f32 %v962, %v962
    %v975 = vmul.f32 %v967, %v967
    %v976 = vmul.f32 %v970, %v970
    %977 = vadd.xlane.f32.xlu0 %v973
    %v978 = vpop.xlane.xlu0 %977
    %979 = vadd.xlane.f32.xlu0 %v974
    %v980 = vpop.xlane.xlu0 %979
    %981 = vadd.xlane.f32.xlu0 %v975
    %v982 = vpop.xlane.xlu0 %981
    %983 = vadd.xlane.f32.xlu0 %v976
    %v984 = vpop.xlane.xlu0 %983
    %v985 = vmax.f32 %v978, 1e-24
    %v986 = vmax.f32 %v980, 1e-24
    %v987 = vmax.f32 %v982, 1e-24
    %v988 = vmax.f32 %v984, 1e-24
    %v989 = vrsqrt.pop %v985
    %v990 = vrsqrt.pop %v986
    %v991 = vrsqrt.pop %v987
    %v992 = vrsqrt.pop %v988
    %v993 = vmul.f32 %v959, %v989
    %v994 = vmul.f32 %v962, %v990
    %v995 = vmul.f32 %v967, %v991
    %v996 = vmul.f32 %v970, %v992
    %997 = vst [vmem:[#allocation11] sm:$0xff] %v993
    %998 = vst [vmem:[#allocation11 + $0x8] sm:$0xff] %v994
    %999 = vst [vmem:[#allocation11 + $0x10] sm:$0xff] %v995
    %1000 = vst [vmem:[#allocation11 + $0x18] sm:$0xff] %v996
    // Predicated region
    $region82: #{_lambda_.1} parent=1 // pred_check
      _
    $region83: #{_lambda_.1} parent=1 // pred_check_branch
      %1002 = sbr.rel (0) target = $region85
    $region84: #{_lambda_.1} parent=1 // pred_region
      %s1004 = ssub.s32 512, 512
      %1005 = vsyncadd [#allocation4], %s1004
      %s1006 = sshll.u32 [#allocation10], 4
      %s1007 = int_to_ptr.vmem [resolvable:$true] %s1006
      %1012 = dma.vmem_to_hbm [thread:$0]  %s1007, 512, %s16, [#allocation4], 128, 128, 8
    $region85: #{_lambda_.1} parent=1 // pred_fallthru
      _
    // Predicated region
    $region86: #{_lambda_.1} parent=1 // pred_check
      _
    $region87: #{_lambda_.1} parent=1 // pred_check_branch
      %1014 = sbr.rel (0) target = $region89
    $region88: #{_lambda_.1} parent=1 // pred_region
      %s1016 = ssub.s32 512, 512
      %1017 = vsyncadd [#allocation12], %s1016
      %s1018 = sshll.u32 [#allocation11], 4
      %s1019 = int_to_ptr.vmem [resolvable:$true] %s1018
      %1024 = dma.vmem_to_hbm [thread:$0]  %s1019, 512, %s17, [#allocation12], 128, 128, 8
    $region89: #{_lambda_.1} parent=1 // pred_fallthru
      _
    // Predicated region
    $region90: #{_lambda_.1} parent=1 // pred_check
      _
    $region91: #{_lambda_.1} parent=1 // pred_check_branch
      %1026 = sbr.rel (0) target = $region93
    $region92: #{_lambda_.1} parent=1 // pred_region
      %1027 = dma.done [#allocation4], 512
    $region93: #{_lambda_.1} parent=1 // pred_fallthru
      _
    // Predicated region
    $region94: #{_lambda_.1} parent=1 // pred_check
      _
    $region95: #{_lambda_.1} parent=1 // pred_check_branch
      %1029 = sbr.rel (0) target = $region97
    $region96: #{_lambda_.1} parent=1 // pred_region
      %1030 = dma.done [#allocation12], 512
    $region97: #{_lambda_.1} parent=1 // pred_fallthru
      _
    %1031 = vsyncpa [#allocation3], 1
    %1032 = vsyncpa [#allocation6], 1
    %1033 = vsyncpa [#allocation9], 1
    %1034 = vsyncpa [#allocation4], 1
    %1035 = vsyncpa [#allocation12], 1

</llo_original>
